<compile_context>
chip_gen: v7x
topology: tpu7x:2x2x1
jax: 0.10.0
libtpu: 0.0.40
codegen_flags: <defaults>
</compile_context>

<pallas_src>
import numpy as np
import jax
import jax.numpy as jnp
from jax import lax
from jax.experimental import pallas as pl
from jax.experimental.pallas import tpu as pltpu


def _round_up(x, m):
    return ((x + m - 1) // m) * m


# ----------------------------- kernels --------------------------------------

def project_kernel(x_ref, w_ref, o_ref):
    # x @ W  -- bf16 MXU inputs, f32 accumulation, f32 output.
    x = x_ref[...].astype(jnp.bfloat16)
    w = w_ref[...].astype(jnp.bfloat16)
    o_ref[...] = jnp.dot(x, w, preferred_element_type=jnp.float32)


def mlp2_kernel(x_ref, w1_ref, b1_ref, p1_ref, w2_ref, b2_ref, p2_ref, o_ref):
    # tr_inter: PReLU -> Linear -> PReLU -> Linear on a tiny [B, C] block (f32).
    x = x_ref[...]
    p1 = p1_ref[0, 0]
    h = jnp.where(x > 0, x, p1 * x)                                  # PReLU
    h = jnp.dot(h, w1_ref[...], preferred_element_type=jnp.float32) + b1_ref[...]
    p2 = p2_ref[0, 0]
    h = jnp.where(h > 0, h, p2 * h)                                  # PReLU
    o_ref[...] = jnp.dot(h, w2_ref[...],
                         preferred_element_type=jnp.float32) + b2_ref[...]


_TRANS_B = (((1,), (1,)), ((), ()))      # contract last dim of both operands


def ssi_kernel(rels_ref, x1_ref, x2_ref, w1a_ref, w1b_ref, w1c_ref,
               b1_ref, w2a8_ref, scal_ref, o_ref):
    """Hot path: PReLU -> Linear(3C->C) -> PReLU -> folded score.

    The concat over [rels | x1 | x2] is realized as three (C,C) matmuls; the
    trailing Linear(C->C) + (a * .).sum(-1) is folded into the vector
    w2a = W2 @ a and evaluated as an A.B^T matmul so the per-row scores land
    lane-dense in a (1, TP) output row.
    scal_ref (SMEM) holds [prelu1_slope, prelu2_slope, sum(b2 * a)].
    """
    p1 = scal_ref[0]
    p2 = scal_ref[1]
    b2a = scal_ref[2]

    def prelu_to_bf16(ref):
        v = ref[...].astype(jnp.float32)          # PReLU kept in f32 (v5e-safe)
        return jnp.where(v > 0, v, p1 * v).astype(jnp.bfloat16)

    h = (jnp.dot(prelu_to_bf16(rels_ref), w1a_ref[...],
                 preferred_element_type=jnp.float32)
         + jnp.dot(prelu_to_bf16(x1_ref), w1b_ref[...],
                   preferred_element_type=jnp.float32)
         + jnp.dot(prelu_to_bf16(x2_ref), w1c_ref[...],
                   preferred_element_type=jnp.float32)
         + b1_ref[...])                                              # [TP, C] f32
    h = jnp.where(h > 0, h, p2 * h)                                  # PReLU, f32
    # scores[i, j] = sum_c w2a8[i, c] * h[j, c]  (all 8 rows identical)
    scores = lax.dot_general(w2a8_ref[...], h, _TRANS_B,
                             preferred_element_type=jnp.float32)     # [8, TP]
    o_ref[...] = scores[0:1, :] + b2a                                # [1, TP]


# ----------------------------- wrappers --------------------------------------

def project(x, w, *, max_row_tile=256):
    """x @ w with a row-tiled 'parallel' grid (keeps VMEM bounded on v7x)."""
    n, c = x.shape
    tile = min(max_row_tile, _round_up(n, 8))
    n_pad = _round_up(n, tile)
    x_pad = jnp.pad(x, ((0, n_pad - n), (0, 0))) if n_pad != n else x
    out = pl.pallas_call(
        project_kernel,
        out_shape=jax.ShapeDtypeStruct((n_pad, c), jnp.float32),
        grid=(n_pad // tile,),
        in_specs=[pl.BlockSpec((tile, c), lambda i: (i, 0)),
                  pl.BlockSpec((c, c), lambda i: (0, 0))],
        out_specs=pl.BlockSpec((tile, c), lambda i: (i, 0)),
        compiler_params=pltpu.CompilerParams(
            dimension_semantics=("parallel",)),
    )(x_pad, w)
    return out[:n]


def tr_inter(x, w1, b1, p1, w2, b2, p2):
    # [B, C] is tiny -> single whole-array invocation.
    return pl.pallas_call(
        mlp2_kernel,
        out_shape=jax.ShapeDtypeStruct((x.shape[0], w2.shape[1]), jnp.float32),
    )(x, w1, b1, p1, w2, b2, p2)


def ssi(relsg, x1g, x2g, w1a, w1b, w1c, b1, w2a8, scal, *, tp):
    """Per-pair interaction scores over the P padded pair rows (hot path)."""
    p_pad, c = x1g.shape
    assert p_pad % tp == 0 and tp % 128 == 0
    n_tiles = p_pad // tp
    flops = 2 * p_pad * (3 * c) * c + 2 * p_pad * c * 8
    bytes_accessed = 3 * p_pad * c * 2 + p_pad * 4 + 3 * c * c * 2
    out = pl.pallas_call(
        ssi_kernel,
        out_shape=jax.ShapeDtypeStruct((1, p_pad), jnp.float32),
        grid=(n_tiles,),
        in_specs=[
            pl.BlockSpec((tp, c), lambda i: (i, 0)),              # rels rows (bf16)
            pl.BlockSpec((tp, c), lambda i: (i, 0)),              # x1 rows   (bf16)
            pl.BlockSpec((tp, c), lambda i: (i, 0)),              # x2 rows   (bf16)
            pl.BlockSpec((c, c), lambda i: (0, 0)),               # w1[:C]    (bf16)
            pl.BlockSpec((c, c), lambda i: (0, 0)),               # w1[C:2C]  (bf16)
            pl.BlockSpec((c, c), lambda i: (0, 0)),               # w1[2C:]   (bf16)
            pl.BlockSpec((1, c), lambda i: (0, 0)),               # b1        (f32)
            pl.BlockSpec((8, c), lambda i: (0, 0)),               # w2@a, x8  (f32)
            pl.BlockSpec(memory_space=pltpu.MemorySpace.SMEM),    # [p1,p2,b2a]
        ],
        out_specs=pl.BlockSpec((1, tp), lambda i: (0, i)),        # lane-dense scores
        compiler_params=pltpu.CompilerParams(
            dimension_semantics=("parallel",)),
        cost_estimate=pl.CostEstimate(
            flops=flops, transcendentals=0, bytes_accessed=bytes_accessed),
    )(relsg, x1g, x2g, w1a, w1b, w1c, b1, w2a8, scal)
    return out[0]


# ----------------------------- glue / driver ---------------------------------

def glorot(key, shape):
    fan_in, fan_out = shape[0], shape[1]
    limit = float(np.sqrt(6.0 / (fan_in + fan_out)))
    return jax.random.uniform(key, shape, jnp.float32, -limit, limit)


def init_params(key, c):
    ks = jax.random.split(key, 8)
    return {
        # module-level weights
        "weight_1": glorot(ks[0], (c, c)),
        "weight_2": glorot(ks[1], (c, c)),
        "a": glorot(ks[2], (1, c)),
        # tr_inter: PReLU, Linear(C,C), PReLU, Linear(C,C)
        "tr_p1": jnp.full((1, 1), 0.25, jnp.float32),
        "tr_w1": glorot(ks[3], (c, c)),            # stored as x @ W layout
        "tr_b1": jnp.zeros((1, c), jnp.float32),
        "tr_p2": jnp.full((1, 1), 0.25, jnp.float32),
        "tr_w2": glorot(ks[4], (c, c)),
        "tr_b2": jnp.zeros((1, c), jnp.float32),
        # mlp: PReLU, Linear(3C,C), PReLU, Linear(C,C)
        "mlp_p1": jnp.full((1, 1), 0.25, jnp.float32),
        "mlp_w1": glorot(ks[5], (3 * c, c)),
        "mlp_b1": jnp.zeros((1, c), jnp.float32),
        "mlp_p2": jnp.full((1, 1), 0.25, jnp.float32),
        "mlp_w2": glorot(ks[6], (c, c)),
        "mlp_b2": jnp.zeros((1, c), jnp.float32),
        # self.bias exists in __init__ but is unused in forward
        "bias": jnp.zeros((c,), jnp.float32),
    }


def build_pair_indices(d1, d2):
    """Cartesian node-pair indices per graph pair (matches ind_1 / ind_2)."""
    off1 = np.concatenate([[0], np.cumsum(d1)[:-1]])
    off2 = np.concatenate([[0], np.cumsum(d2)[:-1]])
    ind_1 = np.concatenate(
        [np.repeat(np.arange(d1[e]), d2[e]) + off1[e] for e in range(len(d1))])
    ind_2 = np.concatenate(
        [np.tile(np.arange(d2[e]), d1[e]) + off2[e] for e in range(len(d1))])
    return ind_1.astype(np.int32), ind_2.astype(np.int32)


def interactions_forward(params, x_1, batch_1, x_2, batch_2, inter):
    c = x_1.shape[1]
    b = inter.shape[0]
    d1 = np.bincount(np.asarray(batch_1), minlength=b)
    d2 = np.bincount(np.asarray(batch_2), minlength=b)

    # node-feature projections (Pallas, row-tiled)
    x1p = project(x_1, params["weight_1"])
    x2p = project(x_2, params["weight_2"])

    # data-dependent Cartesian pairing indices (host glue)
    ind_1, ind_2 = build_pair_indices(d1, d2)
    size_1_2 = d1 * d2
    P = int(size_1_2.sum())
    rep_idx = np.repeat(np.arange(b), size_1_2).astype(np.int32)

    # tr_inter(inter) (Pallas)
    rels = tr_inter(inter, params["tr_w1"], params["tr_b1"], params["tr_p1"],
                    params["tr_w2"], params["tr_b2"], params["tr_p2"])

    # Row gathers stay in XLA but are stored bf16 (halves hot-path HBM reads);
    # the [P, 3C] concat is never materialized (w1 split inside the kernel).
    # TODO(synk): fuse the row gathers themselves into the ssi kernel (manual
    # DMA / in-kernel take) so the [P, C] streams are never written to HBM.
    x1g = x1p[ind_1].astype(jnp.bfloat16)
    x2g = x2p[ind_2].astype(jnp.bfloat16)
    relsg = rels[rep_idx].astype(jnp.bfloat16)

    # pad pair rows to the hot-path row tile (big tiles amortize grid overhead)
    tp = min(1024, _round_up(max(P, 1), 128))
    p_pad = _round_up(max(P, 1), tp)
    pad = ((0, p_pad - P), (0, 0))
    relsg = jnp.pad(relsg, pad)
    x1g = jnp.pad(x1g, pad)
    x2g = jnp.pad(x2g, pad)

    # split w1 along the concat axis; fold `a` into w2 (+ scalar bias term)
    w1 = params["mlp_w1"]
    w1a = w1[:c].astype(jnp.bfloat16)
    w1b = w1[c:2 * c].astype(jnp.bfloat16)
    w1c = w1[2 * c:].astype(jnp.bfloat16)
    w2a8 = jnp.tile((params["mlp_w2"] @ params["a"].T).T, (8, 1))   # [8, C] f32
    b2a = jnp.sum(params["mlp_b2"] * params["a"])
    scal = jnp.stack([params["mlp_p1"][0, 0], params["mlp_p2"][0, 0], b2a])

    ans_ssi = ssi(relsg, x1g, x2g, w1a, w1b, w1c,
                  params["mlp_b1"], w2a8, scal, tp=tp)[:P]

    ans = jax.ops.segment_sum(ans_ssi, jnp.asarray(rep_idx), num_segments=b)
    return ans, ans_ssi


def reference_forward(params, x_1, batch_1, x_2, batch_2, inter):
    """Pure-JAX f32 reference (same math, no Pallas, no folding)."""
    def prelu(x, p):
        return jnp.where(x > 0, x, p * x)

    b = inter.shape[0]
    d1 = np.bincount(np.asarray(batch_1), minlength=b)
    d2 = np.bincount(np.asarray(batch_2), minlength=b)
    x1p = x_1 @ params["weight_1"]
    x2p = x_2 @ params["weight_2"]
    ind_1, ind_2 = build_pair_indices(d1, d2)
    size_1_2 = d1 * d2
    rep_idx = np.repeat(np.arange(b), size_1_2).astype(np.int32)

    rels = prelu(inter, params["tr_p1"][0, 0])
    rels = rels @ params["tr_w1"] + params["tr_b1"]
    rels = prelu(rels, params["tr_p2"][0, 0])
    rels = rels @ params["tr_w2"] + params["tr_b2"]

    inputs = jnp.concatenate([rels[rep_idx], x1p[ind_1], x2p[ind_2]], axis=1)
    h = prelu(inputs, params["mlp_p1"][0, 0])
    h = h @ params["mlp_w1"] + params["mlp_b1"]
    h = prelu(h, params["mlp_p2"][0, 0])
    h = h @ params["mlp_w2"] + params["mlp_b2"]
    ans_ssi = jnp.sum(params["a"] * h, axis=-1)
    ans = jax.ops.segment_sum(ans_ssi, jnp.asarray(rep_idx), num_segments=b)
    return ans, ans_ssi


if __name__ == "__main__":
    C = 32                 # in_channels
    B = 2                  # number of graph pairs
    d1 = np.array([3, 5])  # nodes per graph, side 1  -> N1 = 8
    d2 = np.array([4, 2])  # nodes per graph, side 2  -> N2 = 6
    N1, N2 = int(d1.sum()), int(d2.sum())

    key = jax.random.PRNGKey(0)
    kx1, kx2, kin, kpar = jax.random.split(key, 4)
    x_1 = jax.random.normal(kx1, (N1, C), jnp.float32)
    x_2 = jax.random.normal(kx2, (N2, C), jnp.float32)
    inter = jax.random.normal(kin, (B, C), jnp.float32)
    batch_1 = np.repeat(np.arange(B), d1).astype(np.int32)
    batch_2 = np.repeat(np.arange(B), d2).astype(np.int32)

    params = init_params(kpar, C)

    ans, ans_ssi = interactions_forward(params, x_1, batch_1, x_2, batch_2, inter)
    ans = jax.block_until_ready(ans)
    ans_ssi = jax.block_until_ready(ans_ssi)

    ref_ans, ref_ssi = reference_forward(params, x_1, batch_1, x_2, batch_2, inter)
    # Tolerance loosened (vs 1e-4 in the all-f32 version) because the hot-path
    # activations/weights are fed to the MXU as bf16 (f32 accumulation).
    assert np.allclose(np.asarray(ans), np.asarray(ref_ans), rtol=5e-2, atol=5e-2)
    assert np.allclose(np.asarray(ans_ssi), np.asarray(ref_ssi), rtol=5e-2, atol=5e-2)

    print("KERNEL_OK")
</pallas_src>

<mosaic_0001>
module attributes {stable_mosaic.version = 11 : i64} {
  func.func @project_kernel(%arg0: i32, %arg1: memref<8x32xf32, #tpu.memory_space<vmem>>, %arg2: memref<32x32xf32, #tpu.memory_space<vmem>>, %arg3: memref<8x32xf32, #tpu.memory_space<vmem>>) attributes {dimension_semantics = [#tpu.dimension_semantics<parallel>], iteration_bounds = array<i64: 1>, scalar_prefetch = 0 : i64, scratch_operands = 0 : i64, tpu.core_type = #tpu.core_type<tc>, window_params = [{transform_indices = @transform_0, window_bounds = array<i64: 8, 32>}, {pipeline_mode = #tpu.pipeline_mode<synchronous>, transform_indices = @transform_1, window_bounds = array<i64: 32, 32>}, {transform_indices = @transform_2, window_bounds = array<i64: 8, 32>}]} {
    %c0 = arith.constant 0 : index
    %c0_0 = arith.constant 0 : index
    %0 = vector.load %arg1[%c0, %c0_0] : memref<8x32xf32, #tpu.memory_space<vmem>>, vector<8x32xf32>
    %1 = arith.truncf %0 : vector<8x32xf32> to vector<8x32xbf16>
    %c0_1 = arith.constant 0 : index
    %c0_2 = arith.constant 0 : index
    %2 = vector.load %arg2[%c0_1, %c0_2] : memref<32x32xf32, #tpu.memory_space<vmem>>, vector<32x32xf32>
    %3 = arith.truncf %2 : vector<32x32xf32> to vector<32x32xbf16>
    %cst = arith.constant dense<0.000000e+00> : vector<8x32xf32>
    %4 = tpu.matmul %1, %3, %cst {dimension_numbers = #tpu.dot_dimension_numbers<[1], [0], [0], [1], [0, 0, 1, 1], [], []>} : vector<8x32xbf16>, vector<32x32xbf16>, vector<8x32xf32> -> vector<8x32xf32>
    %c0_3 = arith.constant 0 : index
    %c0_4 = arith.constant 0 : index
    %5 = vector.load %arg3[%c0_3, %c0_4] : memref<8x32xf32, #tpu.memory_space<vmem>>, vector<8x32xf32>
    tpu.vector_store %arg3[%c0_3, %c0_4], %4 {strides = array<i32>} : memref<8x32xf32, #tpu.memory_space<vmem>>, vector<8x32xf32>,
    return
  }
  func.func @transform_0(%arg0: i32) -> (i32, i32) {
    %c0_i32 = arith.constant 0 : i32
    %c0_i32_0 = arith.constant 0 : i32
    return %arg0, %c0_i32 : i32, i32
  }
  func.func @transform_1(%arg0: i32) -> (i32, i32) {
    %c0_i32 = arith.constant 0 : i32
    %c0_i32_0 = arith.constant 0 : i32
    %c0_i32_1 = arith.constant 0 : i32
    return %c0_i32, %c0_i32_0 : i32, i32
  }
  func.func @transform_2(%arg0: i32) -> (i32, i32) {
    %c0_i32 = arith.constant 0 : i32
    %c0_i32_0 = arith.constant 0 : i32
    return %arg0, %c0_i32 : i32, i32
  }
}

</mosaic_0001>

<llo_original>
// kernel: tpu_custom_call.1
$region0: #{tpu_custom_call.1}
  #allocation0 [shape = 'u32[]', space=smem, size = 0x4, offset = 0x4, fixed_abs, tag = 'smem constant byte address 0x4 - core index']
  #allocation1 [shape = 'u32[144,128]{1,0:T(1,128)}', space=vmem, size = 0x12000, scoped, tag = 'internal scratch']
  %s0 = inlined_call_operand.hbm [shape: f32[8,32], index: 0, kind: input, shape index: {}]
  %s1 = inlined_call_operand.hbm [shape: f32[32,32], index: 1, kind: input, shape index: {}]
  %s2 = inlined_call_operand.hbm [shape: f32[8,32], index: 2, kind: output, shape index: {}]
  %s3 = sld [smem:[#allocation0]]
  $region26: #{tpu_custom_call.1} parent=0
    _
  %s5 = ssub.s32 1, %s3
  %s6 = scalar_select 0, %s5, %s3
  $region1: #{tpu_custom_call.1} parent=0
    #allocation2 [shape = 'u8[4096]{0}', space=vmem, size = 0x1000, scoped, tag = 'input window, operand 0, single buffered']
    #allocation3 [shape = 's32[1]{0}', space=sflag, size = 0x4, scoped, tag = 'scoped memory for tpu_custom_call.1']
    #allocation4 [shape = 's32[1]{0}', space=sflag, size = 0x4, scoped, tag = 'scoped memory for tpu_custom_call.1']
    #allocation5 [shape = 'u8[16384]{0}', space=vmem, size = 0x4000, scoped, tag = 'input window, operand 1, single buffered']
    #allocation6 [shape = 's32[1]{0}', space=sflag, size = 0x4, scoped, tag = 'scoped memory for tpu_custom_call.1']
    #allocation7 [shape = 'u8[4096]{0}', space=vmem, size = 0x1000, scoped, tag = 'output window, operand 0, single buffered']
    %7 = vsyncpa [#allocation3], 0
    %8 = vsyncpa [#allocation6], 0
    %9 = vsyncpa [#allocation4], 0
    // Predicated region
    $region2: #{tpu_custom_call.1} parent=1 // pred_check
      _
    $region3: #{tpu_custom_call.1} parent=1 // pred_check_branch
      %11 = sbr.rel (0) target = $region5
    $region4: #{tpu_custom_call.1} parent=1 // pred_region
      %s13 = ssub.s32 128, 128
      %14 = vsyncadd [#allocation3], %s13
      %s16 = sshll.u32 [#allocation2], 4
      %s17 = int_to_ptr.vmem [resolvable:$true] %s16
      %19 = dma.hbm_to_vmem [thread:$0]  %s0, 128, %s17, [#allocation3]
    $region5: #{tpu_custom_call.1} parent=1 // pred_fallthru
      _
    // Predicated region
    $region6: #{tpu_custom_call.1} parent=1 // pred_check
      _
    $region7: #{tpu_custom_call.1} parent=1 // pred_check_branch
      %21 = sbr.rel (0) target = $region9
    $region8: #{tpu_custom_call.1} parent=1 // pred_region
      %s23 = ssub.s32 512, 512
      %24 = vsyncadd [#allocation6], %s23
      %s25 = sshll.u32 [#allocation5], 4
      %s26 = int_to_ptr.vmem [resolvable:$true] %s25
      %31 = dma.hbm_to_vmem [thread:$0]  %s1, 512, %s26, [#allocation6], 128, 128, 8
    $region9: #{tpu_custom_call.1} parent=1 // pred_fallthru
      _
    // Predicated region
    $region10: #{tpu_custom_call.1} parent=1 // pred_check
      _
    $region11: #{tpu_custom_call.1} parent=1 // pred_check_branch
      %33 = sbr.rel (0) target = $region13
    $region12: #{tpu_custom_call.1} parent=1 // pred_region
      %34 = dma.done [#allocation3], 128
    $region13: #{tpu_custom_call.1} parent=1 // pred_fallthru
      _
    // Predicated region
    $region14: #{tpu_custom_call.1} parent=1 // pred_check
      _
    $region15: #{tpu_custom_call.1} parent=1 // pred_check_branch
      %36 = sbr.rel (0) target = $region17
    $region16: #{tpu_custom_call.1} parent=1 // pred_region
      %37 = dma.done [#allocation6], 512
    $region17: #{tpu_custom_call.1} parent=1 // pred_fallthru
      _
    %v39 = vld [vmem:[#allocation2] sm:$0xff]
    %v40 = vpack.c.bf16 %v39, %v39
    %v41 = vld [vmem:[#allocation5] sm:$0xff]
    %v42 = vld [vmem:[#allocation5 + $0x8] sm:$0xff]
    %v43 = vld [vmem:[#allocation5 + $0x10] sm:$0xff]
    %v44 = vld [vmem:[#allocation5 + $0x18] sm:$0xff]
    %v45 = vpack.c.bf16 %v42, %v41
    %v46 = vpack.c.bf16 %v44, %v43
    %vm47 = vcmask 261120
    %v49 = vsel %vm47, %v40, 0
    %51 = vmatprep.subr.bf16.mxu0 0
    %52 = vmatpush1.bf16.msra.mxu0 %v45
    %53 = vmatprep.subr.bf16.mxu0 0
    %54 = vmatpush1.bf16.msra.mxu0 %v46
    %55 = vmatprep.subr.bf16.mxu0 0
    %56 = vmatpush1.bf16.msra.mxu0 0
    %57 = vmatprep.subr.bf16.mxu0 0
    %58 = vmatpush1.bf16.msra.mxu0 0
    %59 = vmatprep.subr.bf16.mxu0 0
    %60 = vmatpush1.bf16.msra.mxu0 0
    %61 = vmatprep.subr.bf16.mxu0 0
    %62 = vmatpush1.bf16.msra.mxu0 0
    %63 = vmatprep.subr.bf16.mxu0 0
    %64 = vmatpush1.bf16.msra.mxu0 0
    %65 = vmatprep.subr.bf16.mxu0 0
    %66 = vmatpush1.bf16.msra.mxu0 0
    %67 = vmatprep.subr.bf16.mxu0 0
    %68 = vmatpush1.bf16.msra.mxu0 0
    %69 = vmatprep.subr.bf16.mxu0 0
    %70 = vmatpush1.bf16.msra.mxu0 0
    %71 = vmatprep.subr.bf16.mxu0 0
    %72 = vmatpush1.bf16.msra.mxu0 0
    %73 = vmatprep.subr.bf16.mxu0 0
    %74 = vmatpush1.bf16.msra.mxu0 0
    %75 = vmatprep.subr.bf16.mxu0 0
    %76 = vmatpush1.bf16.msra.mxu0 0
    %77 = vmatprep.subr.bf16.mxu0 0
    %78 = vmatpush1.bf16.msra.mxu0 0
    %79 = vmatprep.subr.bf16.mxu0 0
    %80 = vmatpush1.bf16.msra.mxu0 0
    %81 = vmatprep.subr.bf16.mxu0 0
    %82 = vmatpush1.bf16.msra.mxu0 0
    %83 = vmatprep.mubr.bf16.mxu0 0
    %84 = vmatmul.mubr.bf16.gmra.mrb[0].mxu0 %v49
    %v85 = vpop.f32.mrb[0].mxu0
    %v86 = vadd.f32 0.0, %v85
    %v87 = vpop.f32.mrb[0].mxu0
    %v88 = vpop.f32.mrb[0].mxu0
    %v89 = vpop.f32.mrb[0].mxu0
    %90 = vdwg.mxu0
    %91 = vst.msk [vmem:[#allocation7] sm:$0xff] %vm47, %v86
    // Predicated region
    $region18: #{tpu_custom_call.1} parent=1 // pred_check
      _
    $region19: #{tpu_custom_call.1} parent=1 // pred_check_branch
      %93 = sbr.rel (0) target = $region21
    $region20: #{tpu_custom_call.1} parent=1 // pred_region
      %s95 = ssub.s32 128, 128
      %96 = vsyncadd [#allocation4], %s95
      %s98 = sshll.u32 [#allocation7], 4
      %s99 = int_to_ptr.vmem [resolvable:$true] %s98
      %101 = dma.vmem_to_hbm [thread:$0]  %s99, 128, %s2, [#allocation4]
    $region21: #{tpu_custom_call.1} parent=1 // pred_fallthru
      _
    // Predicated region
    $region22: #{tpu_custom_call.1} parent=1 // pred_check
      _
    $region23: #{tpu_custom_call.1} parent=1 // pred_check_branch
      %103 = sbr.rel (0) target = $region25
    $region24: #{tpu_custom_call.1} parent=1 // pred_region
      %104 = dma.done [#allocation4], 128
    $region25: #{tpu_custom_call.1} parent=1 // pred_fallthru
      _
    %105 = vsyncpa [#allocation3], 1
    %106 = vsyncpa [#allocation6], 1
    %107 = vsyncpa [#allocation4], 1

</llo_original>
